<compile_context>
chip_gen: v5e
topology: v5e:2x2
jax: 0.10.0
libtpu: 0.0.40
codegen_flags: <defaults>
</compile_context>

<pallas_src>
import jax
import jax.numpy as jnp
from jax.experimental import pallas as pl
from jax.experimental.pallas import tpu as pltpu

BN_EPS = 1e-5


# ----------------------------------------------------------------------------
# Fused kernel: GCN (BN folded, block-diag adjacency) -> attention pooling
#               -> trans_layer + classify.  Everything fits in VMEM, so one
#               grid step handles the whole batch with plain 2D matmuls.
# ----------------------------------------------------------------------------
def fused_kernel(a_ref, h_ref, w_ref, gvec_ref,
                 wt1_ref, wt2_ref, wc1_ref, wc2_ref, hvec_ref,
                 out_ref):
    a = a_ref[...]                     # (BN, BN) block-diagonal normalized adjacency
    h = h_ref[...]                     # (BN, D)  node features, graphs stacked
    BN, D = h.shape
    H = w_ref.shape[2]
    B, L = out_ref.shape
    N = BN // B
    dh = wt2_ref.shape[0]
    dc = wc2_ref.shape[0]

    # dgl.mean_nodes on the *input* features                     -> (B, D)
    init = jnp.mean(h.reshape(B, N, D), axis=1)

    def gconv(x, w, sb, b):
        # BatchNorm folded:  A_bd @ (bn(x) @ W) + b == A_bd @ (x @ Wf + sb) + b
        z = jnp.dot(x, w, preferred_element_type=jnp.float32) + sb
        return jnp.dot(a, z, preferred_element_type=jnp.float32) + b

    h1 = h + jax.nn.relu(gconv(h, w_ref[0], gvec_ref[0:1, :], gvec_ref[1:2, :]))
    h2 = h1 + jax.nn.relu(gconv(h1, w_ref[1], gvec_ref[2:3, :], gvec_ref[3:4, :]))

    # GlobalAttentionPooling: gate logit via VPU mul + lane reduce.  The gate
    # bias is constant over nodes, hence softmax-invariant -> dropped.
    gate = jnp.sum(h2 * gvec_ref[4:5, :], axis=-1, keepdims=True)   # (BN, 1)
    gate = gate.reshape(B, N, 1)
    gate = gate - jnp.max(gate, axis=1, keepdims=True)
    e = jnp.exp(gate)
    alpha = e / jnp.sum(e, axis=1, keepdims=True)                   # (B, N, 1)
    gf = jnp.sum(alpha * h2.reshape(B, N, H), axis=1)               # (B, H)

    # Head.  Head BatchNorm folded into wt1/bt1; first Linear done as ONE
    # matmul on the lane concat [init | gf]  (a (B, D+H) tile).
    x = jnp.concatenate([init, gf], axis=-1)                        # (B, D+H)
    x = jax.nn.relu(jnp.dot(x, wt1_ref[...], preferred_element_type=jnp.float32)
                    + hvec_ref[0:1, :dh])
    x = jax.nn.relu(jnp.dot(x, wt2_ref[...], preferred_element_type=jnp.float32)
                    + hvec_ref[1:2, :dh])
    x = jax.nn.relu(jnp.dot(x, wc1_ref[...], preferred_element_type=jnp.float32)
                    + hvec_ref[2:3, :dc])
    out_ref[...] = (jnp.dot(x, wc2_ref[...], preferred_element_type=jnp.float32)
                    + hvec_ref[3:4, :L])


# ----------------------------------------------------------------------------
# One-time parameter preprocessing: fold eval-mode BatchNorm into the adjacent
# GraphConv / Linear weights and pack the small vectors into two slabs so the
# kernel sees 9 operands instead of 18.
# ----------------------------------------------------------------------------
def fold_params(p):
    inv = jnp.float32(1.0) / jnp.sqrt(jnp.float32(1.0) + BN_EPS)
    D, H = p["w1"].shape
    dh = p["wt2"].shape[0]
    dc = p["wc1"].shape[1]
    L = p["wc2"].shape[1]

    # --- GCN BatchNorm (eval: running mean=0, var=1) folded into conv weights
    g_scale = p["gcn_bn_g"][0] * inv               # (D,)
    g_shift = p["gcn_bn_b"][0]                     # (D,)
    w1f = g_scale[:, None] * p["w1"]               # (D, H)
    w2f = g_scale[:, None] * p["w2"]               # (H, H)  (requires D == H)
    w_stack = jnp.stack([w1f, w2f])                # (2, D, H)  one DMA

    gvec = jnp.zeros((8, H), jnp.float32)
    gvec = gvec.at[0].set(g_shift @ p["w1"])       # sb1: pre-aggregation shift
    gvec = gvec.at[1].set(p["b1"][0])
    gvec = gvec.at[2].set(g_shift @ p["w2"])       # sb2
    gvec = gvec.at[3].set(p["b2"][0])
    gvec = gvec.at[4].set(p["wg"][:, 0])           # gate vector (bias dropped)

    # --- head BatchNorm folded into the first trans-layer Linear
    h_scale = p["head_bn_g"][0] * inv              # (D+H,)
    h_shift = p["head_bn_b"][0]                    # (D+H,)
    wt1f = h_scale[:, None] * p["wt1"]             # (D+H, dh)
    bt1f = h_shift @ p["wt1"] + p["bt1"][0]        # (dh,)

    hvec = jnp.zeros((4, dc), jnp.float32)
    hvec = hvec.at[0, :dh].set(bt1f)
    hvec = hvec.at[1, :dh].set(p["bt2"][0])
    hvec = hvec.at[2, :dc].set(p["bc1"][0])
    hvec = hvec.at[3, :L].set(p["bc2"][0])

    return dict(w_stack=w_stack, gvec=gvec, wt1=wt1f,
                wt2=p["wt2"], wc1=p["wc1"], wc2=p["wc2"], hvec=hvec)


# ----------------------------------------------------------------------------
# Per-call wrapper: build block-diagonal adjacency + flat features, launch one
# fused pallas_call.
# ----------------------------------------------------------------------------
def combine_model_forward(a_hat, graph_h, folded):
    B, N, D = graph_h.shape
    H = folded["w_stack"].shape[2]
    dh = folded["wt2"].shape[0]
    dc, L = folded["wc2"].shape
    BN = B * N

    # Block-diagonal normalized adjacency: aggregation for the whole batch is
    # one (BN,BN)@(BN,H) matmul per layer (exact: cross-graph blocks are zero).
    # TODO(synk): build A_bd per B-tile if B*N grows large (A_bd is 4*(BN)^2 B).
    a_bd = (jnp.eye(B, dtype=a_hat.dtype)[:, None, :, None]
            * a_hat[:, :, None, :]).reshape(BN, BN)
    h_flat = graph_h.reshape(BN, D)

    operands = (a_bd, h_flat, folded["w_stack"], folded["gvec"],
                folded["wt1"], folded["wt2"], folded["wc1"], folded["wc2"],
                folded["hvec"])

    def full(arr):
        n = arr.ndim
        return pl.BlockSpec(arr.shape, lambda i, n=n: (0,) * n)

    flops = (2 * BN * (D * H + BN * H)            # conv1: transform + aggregate
             + 2 * BN * (H * H + BN * H)          # conv2
             + 4 * BN * H                         # gate + pooling
             + 2 * B * ((D + H) * dh + dh * dh + dh * dc + dc * L))
    bytes_accessed = 4 * (sum(int(x.size) for x in operands) + B * L)
    cost = pl.CostEstimate(flops=flops, transcendentals=BN,
                           bytes_accessed=bytes_accessed)

    return pl.pallas_call(
        fused_kernel,
        out_shape=jax.ShapeDtypeStruct((B, L), jnp.float32),
        grid=(1,),
        in_specs=[full(x) for x in operands],
        out_specs=pl.BlockSpec((B, L), lambda i: (0, 0)),
        cost_estimate=cost,
        compiler_params=pltpu.CompilerParams(
            dimension_semantics=("arbitrary",)),
    )(*operands)


# ----------------------------------------------------------------------------
# Pure-JAX reference (faithful to the PyTorch module, no folding)
# ----------------------------------------------------------------------------
def reference_forward(a_hat, h, p):
    inv = 1.0 / jnp.sqrt(1.0 + BN_EPS)
    bn = lambda x: x * (p["gcn_bn_g"] * inv) + p["gcn_bn_b"]
    init = jnp.mean(h, axis=1)
    conv = lambda x, w, b: jnp.einsum("bnm,bmd->bnd", a_hat, x @ w) + b
    h1 = h + jax.nn.relu(conv(bn(h), p["w1"], p["b1"]))
    h2 = h1 + jax.nn.relu(conv(bn(h1), p["w2"], p["b2"]))
    gate = h2 @ p["wg"] + p["bg"][0, 0]
    alpha = jax.nn.softmax(gate, axis=1)
    gf = jnp.sum(alpha * h2, axis=1)
    x = jnp.concatenate([init, gf], axis=1)
    x = x * (p["head_bn_g"] * inv) + p["head_bn_b"]
    x = jax.nn.relu(x @ p["wt1"] + p["bt1"])
    x = jax.nn.relu(x @ p["wt2"] + p["bt2"])
    x = jax.nn.relu(x @ p["wc1"] + p["bc1"])
    return x @ p["wc2"] + p["bc2"]


# ----------------------------------------------------------------------------
# Main
# ----------------------------------------------------------------------------
if __name__ == "__main__":
    B, N = 2, 16
    graph_size = graph_hid = 32          # residual adds require equal dims
    label_num = 8
    d_cat = graph_size + graph_hid        # 64
    d_hid = 2 * d_cat                     # 128
    d_cls = 2 * d_hid                     # 256

    key = jax.random.PRNGKey(0)
    ks = jax.random.split(key, 20)

    def init_w(k, shape, fan_in):
        return (jax.random.normal(k, shape, jnp.float32)
                / jnp.sqrt(fan_in)).astype(jnp.float32)

    params = {
        # GCN batchnorm (non-trivial gamma/beta to exercise the weight fold)
        "gcn_bn_g": 1.0 + 0.1 * jax.random.normal(ks[9], (1, graph_size), jnp.float32),
        "gcn_bn_b": 0.1 * jax.random.normal(ks[10], (1, graph_size), jnp.float32),
        # GraphConv weights (stored as (in, out))
        "w1": init_w(ks[0], (graph_size, graph_hid), graph_size),
        "b1": 0.01 * jnp.ones((1, graph_hid), jnp.float32),
        "w2": init_w(ks[1], (graph_hid, graph_hid), graph_hid),
        "b2": 0.01 * jnp.ones((1, graph_hid), jnp.float32),
        # GlobalAttentionPooling gate (bias non-zero: kernel relies on softmax
        # shift-invariance to drop it)
        "wg": init_w(ks[2], (graph_hid, 1), graph_hid),
        "bg": jnp.full((1, 1), 0.25, jnp.float32),
        # trans_layer
        "head_bn_g": 1.0 + 0.1 * jax.random.normal(ks[11], (1, d_cat), jnp.float32),
        "head_bn_b": 0.1 * jax.random.normal(ks[12], (1, d_cat), jnp.float32),
        "wt1": init_w(ks[3], (d_cat, d_hid), d_cat),
        "bt1": 0.01 * jnp.ones((1, d_hid), jnp.float32),
        "wt2": init_w(ks[4], (d_hid, d_hid), d_hid),
        "bt2": 0.01 * jnp.ones((1, d_hid), jnp.float32),
        # classify
        "wc1": init_w(ks[5], (d_hid, d_cls), d_hid),
        "bc1": 0.01 * jnp.ones((1, d_cls), jnp.float32),
        "wc2": init_w(ks[6], (d_cls, label_num), d_cls),
        "bc2": jnp.zeros((1, label_num), jnp.float32),
    }

    # Node features
    graph_h = jax.random.normal(ks[7], (B, N, graph_size), jnp.float32)

    # Dense graph: random symmetric adjacency + self loops, then GCN norm
    raw = jax.random.uniform(ks[8], (B, N, N)) < 0.3
    adj = (raw | jnp.swapaxes(raw, 1, 2)).astype(jnp.float32)
    adj = jnp.maximum(adj, jnp.eye(N, dtype=jnp.float32)[None])   # self loops
    deg = jnp.sum(adj, axis=-1)
    d_inv_sqrt = 1.0 / jnp.sqrt(deg)
    a_hat = adj * d_inv_sqrt[:, :, None] * d_inv_sqrt[:, None, :]  # D^-1/2 A D^-1/2

    folded = jax.tree_util.tree_map(jax.block_until_ready, fold_params(params))

    out = combine_model_forward(a_hat, graph_h, folded)
    out = jax.block_until_ready(out)

    ref = reference_forward(a_hat, graph_h, params)
    assert out.shape == (B, label_num)
    assert jnp.allclose(out, ref, atol=1e-4, rtol=1e-4), (out, ref)

    print("KERNEL_OK")
</pallas_src>

<mosaic_0001>
module attributes {stable_mosaic.version = 11 : i64} {
  func.func @fused_kernel(%arg0: i32, %arg1: memref<32x32xf32, #tpu.memory_space<vmem>>, %arg2: memref<32x32xf32, #tpu.memory_space<vmem>>, %arg3: memref<2x32x32xf32, #tpu.memory_space<vmem>>, %arg4: memref<8x32xf32, #tpu.memory_space<vmem>>, %arg5: memref<64x128xf32, #tpu.memory_space<vmem>>, %arg6: memref<128x128xf32, #tpu.memory_space<vmem>>, %arg7: memref<128x256xf32, #tpu.memory_space<vmem>>, %arg8: memref<256x8xf32, #tpu.memory_space<vmem>>, %arg9: memref<4x256xf32, #tpu.memory_space<vmem>>, %arg10: memref<2x8xf32, #tpu.memory_space<vmem>>) attributes {dimension_semantics = [#tpu.dimension_semantics<arbitrary>], iteration_bounds = array<i64: 1>, scalar_prefetch = 0 : i64, scratch_operands = 0 : i64, tpu.core_type = #tpu.core_type<tc>, window_params = [{pipeline_mode = #tpu.pipeline_mode<synchronous>, transform_indices = @transform_0, window_bounds = array<i64: 32, 32>}, {pipeline_mode = #tpu.pipeline_mode<synchronous>, transform_indices = @transform_1, window_bounds = array<i64: 32, 32>}, {pipeline_mode = #tpu.pipeline_mode<synchronous>, transform_indices = @transform_2, window_bounds = array<i64: 2, 32, 32>}, {pipeline_mode = #tpu.pipeline_mode<synchronous>, transform_indices = @transform_3, window_bounds = array<i64: 8, 32>}, {pipeline_mode = #tpu.pipeline_mode<synchronous>, transform_indices = @transform_4, window_bounds = array<i64: 64, 128>}, {pipeline_mode = #tpu.pipeline_mode<synchronous>, transform_indices = @transform_5, window_bounds = array<i64: 128, 128>}, {pipeline_mode = #tpu.pipeline_mode<synchronous>, transform_indices = @transform_6, window_bounds = array<i64: 128, 256>}, {pipeline_mode = #tpu.pipeline_mode<synchronous>, transform_indices = @transform_7, window_bounds = array<i64: 256, 8>}, {pipeline_mode = #tpu.pipeline_mode<synchronous>, transform_indices = @transform_8, window_bounds = array<i64: 4, 256>}, {pipeline_mode = #tpu.pipeline_mode<synchronous>, transform_indices = @transform_9, window_bounds = array<i64: 2, 8>}]} {
    %c0 = arith.constant 0 : index
    %c0_0 = arith.constant 0 : index
    %0 = vector.load %arg1[%c0, %c0_0] : memref<32x32xf32, #tpu.memory_space<vmem>>, vector<32x32xf32>
    %c0_1 = arith.constant 0 : index
    %c0_2 = arith.constant 0 : index
    %1 = vector.load %arg2[%c0_1, %c0_2] : memref<32x32xf32, #tpu.memory_space<vmem>>, vector<32x32xf32>
    %2 = vector.shape_cast %1 : vector<32x32xf32> to vector<2x16x32xf32>
    %cst = arith.constant dense<0.000000e+00> : vector<2x32xf32>
    %3 = vector.multi_reduction <add>, %2, %cst [1] : vector<2x16x32xf32> to vector<2x32xf32>
    %cst_3 = arith.constant 1.600000e+01 : f32
    %4 = vector.broadcast %cst_3 : f32 to vector<2x32xf32>
    %5 = arith.divf %3, %4 : vector<2x32xf32>
    %c0_4 = arith.constant 0 : index
    %c0_5 = arith.constant 0 : index
    %c0_6 = arith.constant 0 : index
    %6 = vector.load %arg3[%c0_4, %c0_5, %c0_6] : memref<2x32x32xf32, #tpu.memory_space<vmem>>, vector<1x32x32xf32>
    %7 = vector.shape_cast %6 : vector<1x32x32xf32> to vector<32x32xf32>
    %c0_7 = arith.constant 0 : index
    %c0_8 = arith.constant 0 : index
    %8 = vector.load %arg4[%c0_7, %c0_8] : memref<8x32xf32, #tpu.memory_space<vmem>>, vector<1x32xf32>
    %c1 = arith.constant 1 : index
    %c0_9 = arith.constant 0 : index
    %9 = vector.load %arg4[%c1, %c0_9] : memref<8x32xf32, #tpu.memory_space<vmem>>, vector<1x32xf32>
    %cst_10 = arith.constant dense<0.000000e+00> : vector<32x32xf32>
    %10 = tpu.matmul %1, %7, %cst_10 {dimension_numbers = #tpu.dot_dimension_numbers<[1], [0], [0], [1], [0, 0, 1, 1], [], []>} : vector<32x32xf32>, vector<32x32xf32>, vector<32x32xf32> -> vector<32x32xf32>
    %11 = vector.broadcast %8 : vector<1x32xf32> to vector<32x32xf32>
    %12 = arith.addf %10, %11 : vector<32x32xf32>
    %cst_11 = arith.constant dense<0.000000e+00> : vector<32x32xf32>
    %13 = tpu.matmul %0, %12, %cst_11 {dimension_numbers = #tpu.dot_dimension_numbers<[1], [0], [0], [1], [0, 0, 1, 1], [], []>} : vector<32x32xf32>, vector<32x32xf32>, vector<32x32xf32> -> vector<32x32xf32>
    %14 = vector.broadcast %9 : vector<1x32xf32> to vector<32x32xf32>
    %15 = arith.addf %13, %14 : vector<32x32xf32>
    %cst_12 = arith.constant 0.000000e+00 : f32
    %16 = vector.broadcast %cst_12 : f32 to vector<32x32xf32>
    %17 = arith.maximumf %15, %16 : vector<32x32xf32>
    %18 = arith.addf %1, %17 : vector<32x32xf32>
    %c1_13 = arith.constant 1 : index
    %c0_14 = arith.constant 0 : index
    %c0_15 = arith.constant 0 : index
    %19 = vector.load %arg3[%c1_13, %c0_14, %c0_15] : memref<2x32x32xf32, #tpu.memory_space<vmem>>, vector<1x32x32xf32>
    %20 = vector.shape_cast %19 : vector<1x32x32xf32> to vector<32x32xf32>
    %c2 = arith.constant 2 : index
    %c0_16 = arith.constant 0 : index
    %21 = vector.load %arg4[%c2, %c0_16] : memref<8x32xf32, #tpu.memory_space<vmem>>, vector<1x32xf32>
    %c3 = arith.constant 3 : index
    %c0_17 = arith.constant 0 : index
    %22 = vector.load %arg4[%c3, %c0_17] : memref<8x32xf32, #tpu.memory_space<vmem>>, vector<1x32xf32>
    %cst_18 = arith.constant dense<0.000000e+00> : vector<32x32xf32>
    %23 = tpu.matmul %18, %20, %cst_18 {dimension_numbers = #tpu.dot_dimension_numbers<[1], [0], [0], [1], [0, 0, 1, 1], [], []>} : vector<32x32xf32>, vector<32x32xf32>, vector<32x32xf32> -> vector<32x32xf32>
    %24 = vector.broadcast %21 : vector<1x32xf32> to vector<32x32xf32>
    %25 = arith.addf %23, %24 : vector<32x32xf32>
    %cst_19 = arith.constant dense<0.000000e+00> : vector<32x32xf32>
    %26 = tpu.matmul %0, %25, %cst_19 {dimension_numbers = #tpu.dot_dimension_numbers<[1], [0], [0], [1], [0, 0, 1, 1], [], []>} : vector<32x32xf32>, vector<32x32xf32>, vector<32x32xf32> -> vector<32x32xf32>
    %27 = vector.broadcast %22 : vector<1x32xf32> to vector<32x32xf32>
    %28 = arith.addf %26, %27 : vector<32x32xf32>
    %cst_20 = arith.constant 0.000000e+00 : f32
    %29 = vector.broadcast %cst_20 : f32 to vector<32x32xf32>
    %30 = arith.maximumf %28, %29 : vector<32x32xf32>
    %31 = arith.addf %18, %30 : vector<32x32xf32>
    %c4 = arith.constant 4 : index
    %c0_21 = arith.constant 0 : index
    %32 = vector.load %arg4[%c4, %c0_21] : memref<8x32xf32, #tpu.memory_space<vmem>>, vector<1x32xf32>
    %33 = vector.broadcast %32 : vector<1x32xf32> to vector<32x32xf32>
    %34 = arith.mulf %31, %33 : vector<32x32xf32>
    %cst_22 = arith.constant dense<0.000000e+00> : vector<32xf32>
    %35 = vector.multi_reduction <add>, %34, %cst_22 [1] : vector<32x32xf32> to vector<32xf32>
    %36 = vector.shape_cast %35 : vector<32xf32> to vector<32x1xf32>
    %37 = vector.shape_cast %36 : vector<32x1xf32> to vector<2x16x1xf32>
    %cst_23 = arith.constant dense<0xFF800000> : vector<2x1xf32>
    %38 = vector.multi_reduction <maximumf>, %37, %cst_23 [1] : vector<2x16x1xf32> to vector<2x1xf32>
    %39 = vector.shape_cast %38 : vector<2x1xf32> to vector<2x1x1xf32>
    %40 = vector.broadcast %39 : vector<2x1x1xf32> to vector<2x16x1xf32>
    %41 = arith.subf %37, %40 : vector<2x16x1xf32>
    %42 = math.exp %41 : vector<2x16x1xf32>
    %cst_24 = arith.constant dense<0.000000e+00> : vector<2x1xf32>
    %43 = vector.multi_reduction <add>, %42, %cst_24 [1] : vector<2x16x1xf32> to vector<2x1xf32>
    %44 = vector.shape_cast %43 : vector<2x1xf32> to vector<2x1x1xf32>
    %45 = vector.broadcast %44 : vector<2x1x1xf32> to vector<2x16x1xf32>
    %46 = arith.divf %42, %45 : vector<2x16x1xf32>
    %47 = vector.shape_cast %31 : vector<32x32xf32> to vector<2x16x32xf32>
    %48 = vector.broadcast %46 : vector<2x16x1xf32> to vector<2x16x32xf32>
    %49 = arith.mulf %48, %47 : vector<2x16x32xf32>
    %cst_25 = arith.constant dense<0.000000e+00> : vector<2x32xf32>
    %50 = vector.multi_reduction <add>, %49, %cst_25 [1] : vector<2x16x32xf32> to vector<2x32xf32>
    %51 = tpu.concatenate %5, %50 in 1 : vector<2x32xf32>, vector<2x32xf32> -> vector<2x64xf32>
    %c0_26 = arith.constant 0 : index
    %c0_27 = arith.constant 0 : index
    %52 = vector.load %arg5[%c0_26, %c0_27] : memref<64x128xf32, #tpu.memory_space<vmem>>, vector<64x128xf32>
    %cst_28 = arith.constant dense<0.000000e+00> : vector<2x128xf32>
    %53 = tpu.matmul %51, %52, %cst_28 {dimension_numbers = #tpu.dot_dimension_numbers<[1], [0], [0], [1], [0, 0, 1, 1], [], []>} : vector<2x64xf32>, vector<64x128xf32>, vector<2x128xf32> -> vector<2x128xf32>
    %c0_29 = arith.constant 0 : index
    %c0_30 = arith.constant 0 : index
    %54 = vector.load %arg9[%c0_29, %c0_30] : memref<4x256xf32, #tpu.memory_space<vmem>>, vector<1x128xf32>
    %55 = vector.broadcast %54 : vector<1x128xf32> to vector<2x128xf32>
    %56 = arith.addf %53, %55 : vector<2x128xf32>
    %cst_31 = arith.constant 0.000000e+00 : f32
    %57 = vector.broadcast %cst_31 : f32 to vector<2x128xf32>
    %58 = arith.maximumf %56, %57 : vector<2x128xf32>
    %c0_32 = arith.constant 0 : index
    %c0_33 = arith.constant 0 : index
    %59 = vector.load %arg6[%c0_32, %c0_33] : memref<128x128xf32, #tpu.memory_space<vmem>>, vector<128x128xf32>
    %cst_34 = arith.constant dense<0.000000e+00> : vector<2x128xf32>
    %60 = tpu.matmul %58, %59, %cst_34 {dimension_numbers = #tpu.dot_dimension_numbers<[1], [0], [0], [1], [0, 0, 1, 1], [], []>} : vector<2x128xf32>, vector<128x128xf32>, vector<2x128xf32> -> vector<2x128xf32>
    %c1_35 = arith.constant 1 : index
    %c0_36 = arith.constant 0 : index
    %61 = vector.load %arg9[%c1_35, %c0_36] : memref<4x256xf32, #tpu.memory_space<vmem>>, vector<1x128xf32>
    %62 = vector.broadcast %61 : vector<1x128xf32> to vector<2x128xf32>
    %63 = arith.addf %60, %62 : vector<2x128xf32>
    %cst_37 = arith.constant 0.000000e+00 : f32
    %64 = vector.broadcast %cst_37 : f32 to vector<2x128xf32>
    %65 = arith.maximumf %63, %64 : vector<2x128xf32>
    %c0_38 = arith.constant 0 : index
    %c0_39 = arith.constant 0 : index
    %66 = vector.load %arg7[%c0_38, %c0_39] : memref<128x256xf32, #tpu.memory_space<vmem>>, vector<128x256xf32>
    %cst_40 = arith.constant dense<0.000000e+00> : vector<2x256xf32>
    %67 = tpu.matmul %65, %66, %cst_40 {dimension_numbers = #tpu.dot_dimension_numbers<[1], [0], [0], [1], [0, 0, 1, 1], [], []>} : vector<2x128xf32>, vector<128x256xf32>, vector<2x256xf32> -> vector<2x256xf32>
    %c2_41 = arith.constant 2 : index
    %c0_42 = arith.constant 0 : index
    %68 = vector.load %arg9[%c2_41, %c0_42] : memref<4x256xf32, #tpu.memory_space<vmem>>, vector<1x256xf32>
    %69 = vector.broadcast %68 : vector<1x256xf32> to vector<2x256xf32>
    %70 = arith.addf %67, %69 : vector<2x256xf32>
    %cst_43 = arith.constant 0.000000e+00 : f32
    %71 = vector.broadcast %cst_43 : f32 to vector<2x256xf32>
    %72 = arith.maximumf %70, %71 : vector<2x256xf32>
    %c0_44 = arith.constant 0 : index
    %c0_45 = arith.constant 0 : index
    %73 = vector.load %arg8[%c0_44, %c0_45] : memref<256x8xf32, #tpu.memory_space<vmem>>, vector<256x8xf32>
    %cst_46 = arith.constant dense<0.000000e+00> : vector<2x8xf32>
    %74 = tpu.matmul %72, %73, %cst_46 {dimension_numbers = #tpu.dot_dimension_numbers<[1], [0], [0], [1], [0, 0, 1, 1], [], []>} : vector<2x256xf32>, vector<256x8xf32>, vector<2x8xf32> -> vector<2x8xf32>
    %c3_47 = arith.constant 3 : index
    %c0_48 = arith.constant 0 : index
    %75 = vector.load %arg9[%c3_47, %c0_48] : memref<4x256xf32, #tpu.memory_space<vmem>>, vector<1x8xf32>
    %76 = vector.broadcast %75 : vector<1x8xf32> to vector<2x8xf32>
    %77 = arith.addf %74, %76 : vector<2x8xf32>
    %c0_49 = arith.constant 0 : index
    %c0_50 = arith.constant 0 : index
    %78 = vector.load %arg10[%c0_49, %c0_50] : memref<2x8xf32, #tpu.memory_space<vmem>>, vector<2x8xf32>
    tpu.vector_store %arg10[%c0_49, %c0_50], %77 {strides = array<i32>} : memref<2x8xf32, #tpu.memory_space<vmem>>, vector<2x8xf32>,
    return
  }
  func.func @transform_0(%arg0: i32) -> (i32, i32) {
    %c0_i32 = arith.constant 0 : i32
    %c0_i32_0 = arith.constant 0 : i32
    %c0_i32_1 = arith.constant 0 : i32
    return %c0_i32, %c0_i32_0 : i32, i32
  }
  func.func @transform_1(%arg0: i32) -> (i32, i32) {
    %c0_i32 = arith.constant 0 : i32
    %c0_i32_0 = arith.constant 0 : i32
    %c0_i32_1 = arith.constant 0 : i32
    return %c0_i32, %c0_i32_0 : i32, i32
  }
  func.func @transform_2(%arg0: i32) -> (i32, i32, i32) {
    %c0_i32 = arith.constant 0 : i32
    %c0_i32_0 = arith.constant 0 : i32
    %c0_i32_1 = arith.constant 0 : i32
    %c0_i32_2 = arith.constant 0 : i32
    return %c0_i32, %c0_i32_0, %c0_i32_1 : i32, i32, i32
  }
  func.func @transform_3(%arg0: i32) -> (i32, i32) {
    %c0_i32 = arith.constant 0 : i32
    %c0_i32_0 = arith.constant 0 : i32
    %c0_i32_1 = arith.constant 0 : i32
    return %c0_i32, %c0_i32_0 : i32, i32
  }
  func.func @transform_4(%arg0: i32) -> (i32, i32) {
    %c0_i32 = arith.constant 0 : i32
    %c0_i32_0 = arith.constant 0 : i32
    %c0_i32_1 = arith.constant 0 : i32
    return %c0_i32, %c0_i32_0 : i32, i32
  }
  func.func @transform_5(%arg0: i32) -> (i32, i32) {
    %c0_i32 = arith.constant 0 : i32
    %c0_i32_0 = arith.constant 0 : i32
    %c0_i32_1 = arith.constant 0 : i32
    return %c0_i32, %c0_i32_0 : i32, i32
  }
  func.func @transform_6(%arg0: i32) -> (i32, i32) {
    %c0_i32 = arith.constant 0 : i32
    %c0_i32_0 = arith.constant 0 : i32
    %c0_i32_1 = arith.constant 0 : i32
    return %c0_i32, %c0_i32_0 : i32, i32
  }
  func.func @transform_7(%arg0: i32) -> (i32, i32) {
    %c0_i32 = arith.constant 0 : i32
    %c0_i32_0 = arith.constant 0 : i32
    %c0_i32_1 = arith.constant 0 : i32
    return %c0_i32, %c0_i32_0 : i32, i32
  }
  func.func @transform_8(%arg0: i32) -> (i32, i32) {
    %c0_i32 = arith.constant 0 : i32
    %c0_i32_0 = arith.constant 0 : i32
    %c0_i32_1 = arith.constant 0 : i32
    return %c0_i32, %c0_i32_0 : i32, i32
  }
  func.func @transform_9(%arg0: i32) -> (i32, i32) {
    %c0_i32 = arith.constant 0 : i32
    %c0_i32_0 = arith.constant 0 : i32
    %c0_i32_1 = arith.constant 0 : i32
    return %c0_i32, %c0_i32_0 : i32, i32
  }
}

</mosaic_0001>

<llo_original>
// kernel: tpu_custom_call.1
$region0: #{tpu_custom_call.1}
  #allocation0 [shape = 'u32[]', space=smem, size = 0x4, offset = 0x4, fixed_abs, tag = 'smem constant byte address 0x4 - core index']
  #allocation1 [shape = 'u32[72,128]{1,0:T(1,128)}', space=vmem, size = 0x9000, scoped, tag = 'internal scratch']
  %s0 = inlined_call_operand.hbm [shape: f32[32,32], index: 0, kind: input, shape index: {}]
  %s1 = inlined_call_operand.hbm [shape: f32[32,32], index: 1, kind: input, shape index: {}]
  %s2 = inlined_call_operand.hbm [shape: f32[2,32,32], index: 2, kind: input, shape index: {}]
  %s3 = inlined_call_operand.vmem [shape: f32[8,32], index: 3, kind: input, shape index: {}]
  %s4 = inlined_call_operand.hbm [shape: f32[64,128], index: 4, kind: input, shape index: {}]
  %s5 = inlined_call_operand.hbm [shape: f32[128,128], index: 5, kind: input, shape index: {}]
  %s6 = inlined_call_operand.vmem [shape: f32[128,256], index: 6, kind: input, shape index: {}]
  %s7 = inlined_call_operand.vmem [shape: f32[256,8], index: 7, kind: input, shape index: {}]
  %s8 = inlined_call_operand.vmem [shape: f32[4,256], index: 8, kind: input, shape index: {}]
  %s9 = inlined_call_operand.hbm [shape: f32[2,8], index: 9, kind: output, shape index: {}]
  %s10 = sld [smem:[#allocation0]]
  $region66: #{tpu_custom_call.1} parent=0
    _
  %s12 = ssub.s32 1, %s10
  %s13 = scalar_select 0, %s12, %s10
  $region1: #{tpu_custom_call.1} parent=0
    #allocation2 [shape = 'u8[16384]{0}', space=vmem, size = 0x4000, scoped, tag = 'input window, operand 0, single buffered']
    #allocation3 [shape = 's32[1]{0}', space=sflag, size = 0x4, scoped, tag = 'scoped memory for tpu_custom_call.1']
    #allocation4 [shape = 's32[1]{0}', space=sflag, size = 0x4, scoped, tag = 'scoped memory for tpu_custom_call.1']
    #allocation5 [shape = 'u8[16384]{0}', space=vmem, size = 0x4000, scoped, tag = 'input window, operand 1, single buffered']
    #allocation6 [shape = 's32[1]{0}', space=sflag, size = 0x4, scoped, tag = 'scoped memory for tpu_custom_call.1']
    #allocation7 [shape = 'u8[32768]{0}', space=vmem, size = 0x8000, scoped, tag = 'input window, operand 2, single buffered']
    #allocation8 [shape = 'u8[32768]{0}', space=vmem, size = 0x8000, scoped, tag = 'input window, operand 4, single buffered']
    #allocation9 [shape = 's32[1]{0}', space=sflag, size = 0x4, scoped, tag = 'scoped memory for tpu_custom_call.1']
    #allocation10 [shape = 'u8[65536]{0}', space=vmem, size = 0x10000, scoped, tag = 'input window, operand 5, single buffered']
    #allocation11 [shape = 'u8[1024]{0}', space=vmem, size = 0x400, scoped, tag = 'output window, operand 0, single buffered']
    %14 = vsyncpa [#allocation3], 0
    %15 = vsyncpa [#allocation6], 0
    %16 = vsyncpa [#allocation9], 0
    %17 = vsyncpa [#allocation4], 0
    // Predicated region
    $region2: #{tpu_custom_call.1} parent=1 // pred_check
      _
    $region3: #{tpu_custom_call.1} parent=1 // pred_check_branch
      %19 = sbr.rel (0) target = $region5
    $region4: #{tpu_custom_call.1} parent=1 // pred_region
      %21 = vsyncadd [#allocation3], 0
      %s22 = sshll.u32 %s0, 4
      %s23 = int_to_ptr.hbm [resolvable:$true] %s22
      %s24 = sshll.u32 [#allocation2], 4
      %s25 = int_to_ptr.vmem [resolvable:$true] %s24
      %30 = dma.hbm_to_vmem [thread:$0]  %s23, 512, %s25, [#allocation3], 128, 128, 8
    $region5: #{tpu_custom_call.1} parent=1 // pred_fallthru
      _
    // Predicated region
    $region6: #{tpu_custom_call.1} parent=1 // pred_check
      _
    $region7: #{tpu_custom_call.1} parent=1 // pred_check_branch
      %32 = sbr.rel (0) target = $region9
    $region8: #{tpu_custom_call.1} parent=1 // pred_region
      %34 = vsyncadd [#allocation6], 0
      %s35 = sshll.u32 %s1, 4
      %s36 = int_to_ptr.hbm [resolvable:$true] %s35
      %s37 = sshll.u32 [#allocation5], 4
      %s38 = int_to_ptr.vmem [resolvable:$true] %s37
      %43 = dma.hbm_to_vmem [thread:$0]  %s36, 512, %s38, [#allocation6], 128, 128, 8
    $region9: #{tpu_custom_call.1} parent=1 // pred_fallthru
      _
    // Predicated region
    $region10: #{tpu_custom_call.1} parent=1 // pred_check
      _
    $region11: #{tpu_custom_call.1} parent=1 // pred_check_branch
      %45 = sbr.rel (0) target = $region13
    $region12: #{tpu_custom_call.1} parent=1 // pred_region
      %47 = vsyncadd [#allocation6], 0
      %s48 = sshll.u32 %s2, 4
      %s49 = int_to_ptr.hbm [resolvable:$true] %s48
      %s50 = sshll.u32 [#allocation7], 4
      %s51 = int_to_ptr.vmem [resolvable:$true] %s50
      %56 = dma.hbm_to_vmem [thread:$0]  %s49, 1024, %s51, [#allocation6], 128, 128, 8
    $region13: #{tpu_custom_call.1} parent=1 // pred_fallthru
      _
    // Predicated region
    $region14: #{tpu_custom_call.1} parent=1 // pred_check
      _
    $region15: #{tpu_custom_call.1} parent=1 // pred_check_branch
      %58 = sbr.rel (0) target = $region17
    $region16: #{tpu_custom_call.1} parent=1 // pred_region
      _
    $region17: #{tpu_custom_call.1} parent=1 // pred_fallthru
      _
    // Predicated region
    $region18: #{tpu_custom_call.1} parent=1 // pred_check
      _
    $region19: #{tpu_custom_call.1} parent=1 // pred_check_branch
      %60 = sbr.rel (0) target = $region21
    $region20: #{tpu_custom_call.1} parent=1 // pred_region
      %62 = vsyncadd [#allocation9], 0
      %s63 = sshll.u32 %s4, 4
      %s64 = int_to_ptr.hbm [resolvable:$true] %s63
      %s65 = sshll.u32 [#allocation8], 4
      %s66 = int_to_ptr.vmem [resolvable:$true] %s65
      %71 = dma.hbm_to_vmem [thread:$0]  %s64, 1024, %s66, [#allocation9], 128, 128, 8
    $region21: #{tpu_custom_call.1} parent=1 // pred_fallthru
      _
    // Predicated region
    $region22: #{tpu_custom_call.1} parent=1 // pred_check
      _
    $region23: #{tpu_custom_call.1} parent=1 // pred_check_branch
      %73 = sbr.rel (0) target = $region25
    $region24: #{tpu_custom_call.1} parent=1 // pred_region
      %75 = vsyncadd [#allocation9], 0
      %s76 = sshll.u32 %s5, 4
      %s77 = int_to_ptr.hbm [resolvable:$true] %s76
      %s78 = sshll.u32 [#allocation10], 4
      %s79 = int_to_ptr.vmem [resolvable:$true] %s78
      %84 = dma.hbm_to_vmem [thread:$0]  %s77, 2048, %s79, [#allocation9], 128, 128, 8
    $region25: #{tpu_custom_call.1} parent=1 // pred_fallthru
      _
    // Predicated region
    $region26: #{tpu_custom_call.1} parent=1 // pred_check
      _
    $region27: #{tpu_custom_call.1} parent=1 // pred_check_branch
      %86 = sbr.rel (0) target = $region29
    $region28: #{tpu_custom_call.1} parent=1 // pred_region
      _
    $region29: #{tpu_custom_call.1} parent=1 // pred_fallthru
      _
    // Predicated region
    $region30: #{tpu_custom_call.1} parent=1 // pred_check
      _
    $region31: #{tpu_custom_call.1} parent=1 // pred_check_branch
      %88 = sbr.rel (0) target = $region33
    $region32: #{tpu_custom_call.1} parent=1 // pred_region
      _
    $region33: #{tpu_custom_call.1} parent=1 // pred_fallthru
      _
    // Predicated region
    $region34: #{tpu_custom_call.1} parent=1 // pred_check
      _
    $region35: #{tpu_custom_call.1} parent=1 // pred_check_branch
      %90 = sbr.rel (0) target = $region37
    $region36: #{tpu_custom_call.1} parent=1 // pred_region
      _
    $region37: #{tpu_custom_call.1} parent=1 // pred_fallthru
      _
    // Predicated region
    $region38: #{tpu_custom_call.1} parent=1 // pred_check
      _
    $region39: #{tpu_custom_call.1} parent=1 // pred_check_branch
      %92 = sbr.rel (0) target = $region41
    $region40: #{tpu_custom_call.1} parent=1 // pred_region
      %94 = dma.done [#allocation3], 512
    $region41: #{tpu_custom_call.1} parent=1 // pred_fallthru
      _
    // Predicated region
    $region42: #{tpu_custom_call.1} parent=1 // pred_check
      _
    $region43: #{tpu_custom_call.1} parent=1 // pred_check_branch
      %96 = sbr.rel (0) target = $region45
    $region44: #{tpu_custom_call.1} parent=1 // pred_region
      %98 = dma.done [#allocation6], 512
    $region45: #{tpu_custom_call.1} parent=1 // pred_fallthru
      _
    // Predicated region
    $region46: #{tpu_custom_call.1} parent=1 // pred_check
      _
    $region47: #{tpu_custom_call.1} parent=1 // pred_check_branch
      %100 = sbr.rel (0) target = $region49
    $region48: #{tpu_custom_call.1} parent=1 // pred_region
      %102 = dma.done [#allocation6], 1024
    $region49: #{tpu_custom_call.1} parent=1 // pred_fallthru
      _
    // Predicated region
    $region50: #{tpu_custom_call.1} parent=1 // pred_check
      _
    $region51: #{tpu_custom_call.1} parent=1 // pred_check_branch
      %104 = sbr.rel (0) target = $region53
    $region52: #{tpu_custom_call.1} parent=1 // pred_region
      %106 = dma.done [#allocation9], 1024
    $region53: #{tpu_custom_call.1} parent=1 // pred_fallthru
      _
    // Predicated region
    $region54: #{tpu_custom_call.1} parent=1 // pred_check
      _
    $region55: #{tpu_custom_call.1} parent=1 // pred_check_branch
      %108 = sbr.rel (0) target = $region57
    $region56: #{tpu_custom_call.1} parent=1 // pred_region
      %110 = dma.done [#allocation9], 2048
    $region57: #{tpu_custom_call.1} parent=1 // pred_fallthru
      _
    %v111 = vld [vmem:[#allocation2] sm:$0xff]
    %v112 = vld [vmem:[#allocation2 + $0x8] sm:$0xff]
    %v113 = vld [vmem:[#allocation2 + $0x10] sm:$0xff]
    %v114 = vld [vmem:[#allocation2 + $0x18] sm:$0xff]
    %v115 = vld [vmem:[#allocation5] sm:$0xff]
    %v116 = vld [vmem:[#allocation5 + $0x8] sm:$0xff]
    %v117 = vld [vmem:[#allocation5 + $0x10] sm:$0xff]
    %v118 = vld [vmem:[#allocation5 + $0x18] sm:$0xff]
    %vm119 = vcmask 261120
    %v120 = vsel %vm119, %v115, 0.0
    %v121 = vsel %vm119, %v116, 0.0
    %v122 = vadd.f32 %v120, %v121
    %v123 = vrot.slane %v122, 4
    %v124 = vadd.f32 %v122, %v123
    %v125 = vrot.slane %v124, 2
    %v126 = vadd.f32 %v124, %v125
    %v127 = vrot.slane %v126, 1
    %v128 = vadd.f32 %v126, %v127
    %v129 = vsel %vm119, %v117, 0.0
    %v130 = vsel %vm119, %v118, 0.0
    %v131 = vadd.f32 %v129, %v130
    %v132 = vrot.slane %v131, 4
    %v133 = vadd.f32 %v131, %v132
    %v134 = vrot.slane %v133, 2
    %v135 = vadd.f32 %v133, %v134
    %v136 = vrot.slane %v135, 1
    %v137 = vadd.f32 %v135, %v136
    %v138 = vrcp.pop 16.0
    %v139 = vmul.f32 16.0, %v138
    %v140 = vsub.f32 1.0, %v139
    %v141 = vmul.f32 %v138, %v140
    %v142 = vadd.f32 %v138, %v141
    %vm143 = vweird.f32 %v138
    %v144 = vsel %vm143, %v138, %v142
    %v145 = vmul.f32 %v128, %v144
    %v146 = vmul.f32 %v137, %v144
    %v147 = vld [vmem:[#allocation7] sm:$0xff]
    %v148 = vld [vmem:[#allocation7 + $0x8] sm:$0xff]
    %v149 = vld [vmem:[#allocation7 + $0x10] sm:$0xff]
    %v150 = vld [vmem:[#allocation7 + $0x18] sm:$0xff]
    %v151 = vld [vmem:[%s3] sm:$0x1]
    %v152 = vld [vmem:[%s3 + $0x1] sm:$0x1]
    %v153 = vperm.slane %v151, 0
    %v155 = vsel %vm119, %v115, 0
    %v158 = vsel %vm119, %v116, 0
    %v161 = vsel %vm119, %v117, 0
    %v164 = vsel %vm119, %v118, 0
    %166 = vmatpush.msra.mxu0 0.0
    %167 = vmatpush.msra.mxu0 0.0
    %168 = vmatpush.msra.mxu0 0.0
    %169 = vmatpush.msra.mxu0 0.0
    %170 = vmatpush.msra.mxu0 0.0
    %171 = vmatpush.msra.mxu0 0.0
    %172 = vmatpush.msra.mxu0 0.0
    %173 = vmatpush.msra.mxu0 0.0
    %174 = vmatpush.msra.mxu0 0.0
    %175 = vmatpush.msra.mxu0 0.0
    %176 = vmatpush.msra.mxu0 0.0
    %177 = vmatpush.msra.mxu0 0.0
    %178 = vmatpush.msra.mxu0 %v150
    %179 = vmatpush.msra.mxu0 %v149
    %180 = vmatpush.msra.mxu0 %v148
    %181 = vmatpush.msra.mxu0 %v147
    %182 = vmatmul.f32.gmra.mxu0 %v155
    %v183 = vpop.f32.mrf.mxu0
    %v184 = vadd.f32 %v153, %v183
    %185 = vmatmul.f32.gmra.mxu0 %v158
    %v186 = vpop.f32.mrf.mxu0
    %v187 = vadd.f32 %v153, %v186
    %188 = vmatmul.f32.gmra.mxu0 %v161
    %v189 = vpop.f32.mrf.mxu0
    %v190 = vadd.f32 %v153, %v189
    %191 = vmatmul.f32.gmra.mxu0 %v164
    %v192 = vpop.f32.mrf.mxu0
    %v193 = vadd.f32 %v153, %v192
    %194 = vdwg.mxu0
    %v195 = vperm.slane %v152, 0
    %v197 = vsel %vm119, %v111, 0
    %v200 = vsel %vm119, %v112, 0
    %v203 = vsel %vm119, %v113, 0
    %v206 = vsel %vm119, %v114, 0
    %208 = vmatpush.msra.mxu0 0.0
    %209 = vmatpush.msra.mxu0 0.0
    %210 = vmatpush.msra.mxu0 0.0
    %211 = vmatpush.msra.mxu0 0.0
    %212 = vmatpush.msra.mxu0 0.0
    %213 = vmatpush.msra.mxu0 0.0
    %214 = vmatpush.msra.mxu0 0.0
    %215 = vmatpush.msra.mxu0 0.0
    %216 = vmatpush.msra.mxu0 0.0
    %217 = vmatpush.msra.mxu0 0.0
    %218 = vmatpush.msra.mxu0 0.0
    %219 = vmatpush.msra.mxu0 0.0
    %220 = vmatpush.msra.mxu0 %v193
    %221 = vmatpush.msra.mxu0 %v190
    %222 = vmatpush.msra.mxu0 %v187
    %223 = vmatpush.msra.mxu0 %v184
    %224 = vmatmul.f32.gmra.mxu0 %v197
    %v225 = vpop.f32.mrf.mxu0
    %v226 = vadd.f32 %v195, %v225
    %227 = vmatmul.f32.gmra.mxu0 %v200
    %v228 = vpop.f32.mrf.mxu0
    %v229 = vadd.f32 %v195, %v228
    %230 = vmatmul.f32.gmra.mxu0 %v203
    %v231 = vpop.f32.mrf.mxu0
    %v232 = vadd.f32 %v195, %v231
    %233 = vmatmul.f32.gmra.mxu0 %v206
    %v234 = vpop.f32.mrf.mxu0
    %v235 = vadd.f32 %v195, %v234
    %236 = vdwg.mxu0
    %v237 = vmax.f32 %v226, 0.0
    %v238 = vmax.f32 %v229, 0.0
    %v239 = vmax.f32 %v232, 0.0
    %v240 = vmax.f32 %v235, 0.0
    %v241 = vadd.f32 %v115, %v237
    %v242 = vadd.f32 %v116, %v238
    %v243 = vadd.f32 %v117, %v239
    %v244 = vadd.f32 %v118, %v240
    %s245 = scalar_lea.vmem [#allocation7], 32
    %v246 = vld [vmem:[%s245] sm:$0xff]
    %v247 = vld [vmem:[%s245 + $0x8] sm:$0xff]
    %v248 = vld [vmem:[%s245 + $0x10] sm:$0xff]
    %v249 = vld [vmem:[%s245 + $0x18] sm:$0xff]
    %v250 = vld [vmem:[%s3 + $0x2] sm:$0x1]
    %v251 = vld [vmem:[%s3 + $0x3] sm:$0x1]
    %v252 = vperm.slane %v250, 0
    %v254 = vsel %vm119, %v241, 0
    %v257 = vsel %vm119, %v242, 0
    %v260 = vsel %vm119, %v243, 0
    %v263 = vsel %vm119, %v244, 0
    %265 = vmatpush.msra.mxu0 0.0
    %266 = vmatpush.msra.mxu0 0.0
    %267 = vmatpush.msra.mxu0 0.0
    %268 = vmatpush.msra.mxu0 0.0
    %269 = vmatpush.msra.mxu0 0.0
    %270 = vmatpush.msra.mxu0 0.0
    %271 = vmatpush.msra.mxu0 0.0
    %272 = vmatpush.msra.mxu0 0.0
    %273 = vmatpush.msra.mxu0 0.0
    %274 = vmatpush.msra.mxu0 0.0
    %275 = vmatpush.msra.mxu0 0.0
    %276 = vmatpush.msra.mxu0 0.0
    %277 = vmatpush.msra.mxu0 %v249
    %278 = vmatpush.msra.mxu0 %v248
    %279 = vmatpush.msra.mxu0 %v247
    %280 = vmatpush.msra.mxu0 %v246
    %281 = vmatmul.f32.gmra.mxu0 %v254
    %v282 = vpop.f32.mrf.mxu0
    %v283 = vadd.f32 %v252, %v282
    %284 = vmatmul.f32.gmra.mxu0 %v257
    %v285 = vpop.f32.mrf.mxu0
    %v286 = vadd.f32 %v252, %v285
    %287 = vmatmul.f32.gmra.mxu0 %v260
    %v288 = vpop.f32.mrf.mxu0
    %v289 = vadd.f32 %v252, %v288
    %290 = vmatmul.f32.gmra.mxu0 %v263
    %v291 = vpop.f32.mrf.mxu0
    %v292 = vadd.f32 %v252, %v291
    %293 = vdwg.mxu0
    %v294 = vperm.slane %v251, 0
    %295 = vmatpush.msra.mxu0 0.0
    %296 = vmatpush.msra.mxu0 0.0
    %297 = vmatpush.msra.mxu0 0.0
    %298 = vmatpush.msra.mxu0 0.0
    %299 = vmatpush.msra.mxu0 0.0
    %300 = vmatpush.msra.mxu0 0.0
    %301 = vmatpush.msra.mxu0 0.0
    %302 = vmatpush.msra.mxu0 0.0
    %303 = vmatpush.msra.mxu0 0.0
    %304 = vmatpush.msra.mxu0 0.0
    %305 = vmatpush.msra.mxu0 0.0
    %306 = vmatpush.msra.mxu0 0.0
    %307 = vmatpush.msra.mxu0 %v292
    %308 = vmatpush.msra.mxu0 %v289
    %309 = vmatpush.msra.mxu0 %v286
    %310 = vmatpush.msra.mxu0 %v283
    %311 = vmatmul.f32.gmra.mxu0 %v197
    %v312 = vpop.f32.mrf.mxu0
    %v313 = vadd.f32 %v294, %v312
    %314 = vmatmul.f32.gmra.mxu0 %v200
    %v315 = vpop.f32.mrf.mxu0
    %v316 = vadd.f32 %v294, %v315
    %317 = vmatmul.f32.gmra.mxu0 %v203
    %v318 = vpop.f32.mrf.mxu0
    %v319 = vadd.f32 %v294, %v318
    %320 = vmatmul.f32.gmra.mxu0 %v206
    %v321 = vpop.f32.mrf.mxu0
    %v322 = vadd.f32 %v294, %v321
    %323 = vdwg.mxu0
    %v324 = vmax.f32 %v313, 0.0
    %v325 = vmax.f32 %v316, 0.0
    %v326 = vmax.f32 %v319, 0.0
    %v327 = vmax.f32 %v322, 0.0
    %v328 = vadd.f32 %v241, %v324
    %v329 = vadd.f32 %v242, %v325
    %v330 = vadd.f32 %v243, %v326
    %v331 = vadd.f32 %v244, %v327
    %v332 = vld [vmem:[%s3 + $0x4] sm:$0x1]
    %v333 = vperm.slane %v332, 0
    %v334 = vmul.f32 %v328, %v333
    %v335 = vmul.f32 %v329, %v333
    %v336 = vmul.f32 %v330, %v333
    %v337 = vmul.f32 %v331, %v333
    %v338 = vsel %vm119, %v334, 0.0
    %339 = vadd.xlane.f32.xlu0 %v338
    %v340 = vpop.xlane.xlu0 %339
    %v341 = vsel %vm119, %v335, 0.0
    %342 = vadd.xlane.f32.xlu0 %v341
    %v343 = vpop.xlane.xlu0 %342
    %v344 = vsel %vm119, %v336, 0.0
    %345 = vadd.xlane.f32.xlu0 %v344
    %v346 = vpop.xlane.xlu0 %345
    %v347 = vsel %vm119, %v337, 0.0
    %348 = vadd.xlane.f32.xlu0 %v347
    %v349 = vpop.xlane.xlu0 %348
    %v350 = vmax.f32 %v340, %v343
    %v351 = vrot.slane %v350, 4
    %v352 = vmax.f32 %v350, %v351
    %v353 = vrot.slane %v352, 2
    %v354 = vmax.f32 %v352, %v353
    %v355 = vrot.slane %v354, 1
    %v356 = vmax.f32 %v354, %v355
    %v357 = vmax.f32 %v346, %v349
    %v358 = vrot.slane %v357, 4
    %v359 = vmax.f32 %v357, %v358
    %v360 = vrot.slane %v359, 2
    %v361 = vmax.f32 %v359, %v360
    %v362 = vrot.slane %v361, 1
    %v363 = vmax.f32 %v361, %v362
    %v364 = vsub.f32 %v340, %v356
    %v365 = vsub.f32 %v343, %v356
    %v366 = vsub.f32 %v346, %v363
    %v367 = vsub.f32 %v349, %v363
    %v368 = vmul.f32 %v364, 1.442695
    %v369 = vpow.pop %v368
    %v370 = vmul.f32 %v365, 1.442695
    %v371 = vpow.pop %v370
    %v372 = vmul.f32 %v366, 1.442695
    %v373 = vpow.pop %v372
    %v374 = vmul.f32 %v367, 1.442695
    %v375 = vpow.pop %v374
    %v376 = vadd.f32 %v369, %v371
    %v377 = vrot.slane %v376, 4
    %v378 = vadd.f32 %v376, %v377
    %v379 = vrot.slane %v378, 2
    %v380 = vadd.f32 %v378, %v379
    %v381 = vrot.slane %v380, 1
    %v382 = vadd.f32 %v380, %v381
    %v383 = vadd.f32 %v373, %v375
    %v384 = vrot.slane %v383, 4
    %v385 = vadd.f32 %v383, %v384
    %v386 = vrot.slane %v385, 2
    %v387 = vadd.f32 %v385, %v386
    %v388 = vrot.slane %v387, 1
    %v389 = vadd.f32 %v387, %v388
    %v390 = vrcp.pop %v382
    %v391 = vmul.f32 %v382, %v390
    %v392 = vsub.f32 1.0, %v391
    %v393 = vmul.f32 %v390, %v392
    %v394 = vadd.f32 %v390, %v393
    %vm395 = vweird.f32 %v382
    %vm396 = vweird.f32 %v390
    %vm397 = vmor %vm395, %vm396
    %v398 = vsel %vm397, %v390, %v394
    %v399 = vand.u32 2147483647, %v382
    %vm400 = vcmp.eq.f32.partialorder %v399, 8.507059e+37
    %v401 = vand.u32 %v382, 2147483648
    %v402 = vor.u32 1.1754944e-38, %v401
    %v403 = vsel %vm400, %v402, %v398
    %v404 = vmul.f32 %v369, %v403
    %v405 = vmul.f32 %v371, %v403
    %v406 = vrcp.pop %v389
    %v407 = vmul.f32 %v389, %v406
    %v408 = vsub.f32 1.0, %v407
    %v409 = vmul.f32 %v406, %v408
    %v410 = vadd.f32 %v406, %v409
    %vm411 = vweird.f32 %v389
    %vm412 = vweird.f32 %v406
    %vm413 = vmor %vm411, %vm412
    %v414 = vsel %vm413, %v406, %v410
    %v415 = vand.u32 2147483647, %v389
    %vm416 = vcmp.eq.f32.partialorder %v415, 8.507059e+37
    %v417 = vand.u32 %v389, 2147483648
    %v418 = vor.u32 1.1754944e-38, %v417
    %v419 = vsel %vm416, %v418, %v414
    %v420 = vmul.f32 %v373, %v419
    %v421 = vmul.f32 %v375, %v419
    %v422 = vmul.f32 %v404, %v328
    %v423 = vmul.f32 %v405, %v329
    %v424 = vmul.f32 %v420, %v330
    %v425 = vmul.f32 %v421, %v331
    %v426 = vsel %vm119, %v422, 0.0
    %v427 = vsel %vm119, %v423, 0.0
    %v428 = vadd.f32 %v426, %v427
    %v429 = vrot.slane %v428, 4
    %v430 = vadd.f32 %v428, %v429
    %v431 = vrot.slane %v430, 2
    %v432 = vadd.f32 %v430, %v431
    %v433 = vrot.slane %v432, 1
    %v434 = vadd.f32 %v432, %v433
    %v435 = vsel %vm119, %v424, 0.0
    %v436 = vsel %vm119, %v425, 0.0
    %v437 = vadd.f32 %v435, %v436
    %v438 = vrot.slane %v437, 4
    %v439 = vadd.f32 %v437, %v438
    %v440 = vrot.slane %v439, 2
    %v441 = vadd.f32 %v439, %v440
    %v442 = vrot.slane %v441, 1
    %v443 = vadd.f32 %v441, %v442
    %vm446 = vcmask 1041409
    %v447 = vsel %vm446, %v146, %v145
    %v451 = vsel %vm446, %v443, %v434
    %452 = vrot.lane.b32.xlu0 %v451, 32
    %v453 = vpop.permute.xlu0 %452
    %v455 = vsel %vm119, %v447, %v453
    %v456 = vld [vmem:[#allocation8] sm:$0xff]
    %v457 = vld [vmem:[#allocation8 + $0x8] sm:$0xff]
    %v458 = vld [vmem:[#allocation8 + $0x10] sm:$0xff]
    %v459 = vld [vmem:[#allocation8 + $0x18] sm:$0xff]
    %v460 = vld [vmem:[#allocation8 + $0x20] sm:$0xff]
    %v461 = vld [vmem:[#allocation8 + $0x28] sm:$0xff]
    %v462 = vld [vmem:[#allocation8 + $0x30] sm:$0xff]
    %v463 = vld [vmem:[#allocation8 + $0x38] sm:$0xff]
    %v464 = vld [vmem:[%s8] sm:$0x1]
    %v465 = vperm.slane %v464, 0
    %vm466 = vcmask 523264
    %v468 = vsel %vm466, %v455, 0
    %470 = vmatpush.msra.mxu0 0.0
    %471 = vmatpush.msra.mxu0 0.0
    %472 = vmatpush.msra.mxu0 0.0
    %473 = vmatpush.msra.mxu0 0.0
    %474 = vmatpush.msra.mxu0 0.0
    %475 = vmatpush.msra.mxu0 0.0
    %476 = vmatpush.msra.mxu0 0.0
    %477 = vmatpush.msra.mxu0 0.0
    %478 = vmatpush.msra.mxu0 %v463
    %479 = vmatpush.msra.mxu0 %v462
    %480 = vmatpush.msra.mxu0 %v461
    %481 = vmatpush.msra.mxu0 %v460
    %482 = vmatpush.msra.mxu0 %v459
    %483 = vmatpush.msra.mxu0 %v458
    %484 = vmatpush.msra.mxu0 %v457
    %485 = vmatpush.msra.mxu0 %v456
    %486 = vmatmul.f32.gmra.mxu0 %v468
    %v487 = vpop.f32.mrf.mxu0
    %v488 = vadd.f32 %v465, %v487
    %489 = vdwg.mxu0
    %v490 = vmax.f32 %v488, 0.0
    %v491 = vld [vmem:[#allocation10] sm:$0xff]
    %v492 = vld [vmem:[#allocation10 + $0x8] sm:$0xff]
    %v493 = vld [vmem:[#allocation10 + $0x10] sm:$0xff]
    %v494 = vld [vmem:[#allocation10 + $0x18] sm:$0xff]
    %v495 = vld [vmem:[#allocation10 + $0x20] sm:$0xff]
    %v496 = vld [vmem:[#allocation10 + $0x28] sm:$0xff]
    %v497 = vld [vmem:[#allocation10 + $0x30] sm:$0xff]
    %v498 = vld [vmem:[#allocation10 + $0x38] sm:$0xff]
    %v499 = vld [vmem:[#allocation10 + $0x40] sm:$0xff]
    %v500 = vld [vmem:[#allocation10 + $0x48] sm:$0xff]
    %v501 = vld [vmem:[#allocation10 + $0x50] sm:$0xff]
    %v502 = vld [vmem:[#allocation10 + $0x58] sm:$0xff]
    %v503 = vld [vmem:[#allocation10 + $0x60] sm:$0xff]
    %v504 = vld [vmem:[#allocation10 + $0x68] sm:$0xff]
    %v505 = vld [vmem:[#allocation10 + $0x70] sm:$0xff]
    %v506 = vld [vmem:[#allocation10 + $0x78] sm:$0xff]
    %v507 = vld [vmem:[%s8 + $0x1] sm:$0x1]
    %v508 = vperm.slane %v507, 0
    %509 = vmatpush.msra.mxu0 %v506
    %510 = vmatpush.msra.mxu0 %v505
    %511 = vmatpush.msra.mxu0 %v504
    %512 = vmatpush.msra.mxu0 %v503
    %513 = vmatpush.msra.mxu0 %v502
    %514 = vmatpush.msra.mxu0 %v501
    %515 = vmatpush.msra.mxu0 %v500
    %516 = vmatpush.msra.mxu0 %v499
    %517 = vmatpush.msra.mxu0 %v498
    %518 = vmatpush.msra.mxu0 %v497
    %519 = vmatpush.msra.mxu0 %v496
    %520 = vmatpush.msra.mxu0 %v495
    %521 = vmatpush.msra.mxu0 %v494
    %522 = vmatpush.msra.mxu0 %v493
    %523 = vmatpush.msra.mxu0 %v492
    %524 = vmatpush.msra.mxu0 %v491
    %525 = vmatmul.f32.gmra.mxu0 %v490
    %v526 = vpop.f32.mrf.mxu0
    %v527 = vadd.f32 %v508, %v526
    %528 = vdwg.mxu0
    %v529 = vmax.f32 %v527, 0.0
    %v530 = vld [vmem:[%s6] sm:$0xff]
    %v531 = vld [vmem:[%s6 + $0x8] sm:$0xff]
    %v532 = vld [vmem:[%s6 + $0x10] sm:$0xff]
    %v533 = vld [vmem:[%s6 + $0x18] sm:$0xff]
    %v534 = vld [vmem:[%s6 + $0x20] sm:$0xff]
    %v535 = vld [vmem:[%s6 + $0x28] sm:$0xff]
    %v536 = vld [vmem:[%s6 + $0x30] sm:$0xff]
    %v537 = vld [vmem:[%s6 + $0x38] sm:$0xff]
    %v538 = vld [vmem:[%s6 + $0x40] sm:$0xff]
    %v539 = vld [vmem:[%s6 + $0x48] sm:$0xff]
    %v540 = vld [vmem:[%s6 + $0x50] sm:$0xff]
    %v541 = vld [vmem:[%s6 + $0x58] sm:$0xff]
    %v542 = vld [vmem:[%s6 + $0x60] sm:$0xff]
    %v543 = vld [vmem:[%s6 + $0x68] sm:$0xff]
    %v544 = vld [vmem:[%s6 + $0x70] sm:$0xff]
    %v545 = vld [vmem:[%s6 + $0x78] sm:$0xff]
    %v546 = vld [vmem:[%s6 + $0x80] sm:$0xff]
    %v547 = vld [vmem:[%s6 + $0x88] sm:$0xff]
    %v548 = vld [vmem:[%s6 + $0x90] sm:$0xff]
    %v549 = vld [vmem:[%s6 + $0x98] sm:$0xff]
    %v550 = vld [vmem:[%s6 + $0xa0] sm:$0xff]
    %v551 = vld [vmem:[%s6 + $0xa8] sm:$0xff]
    %v552 = vld [vmem:[%s6 + $0xb0] sm:$0xff]
    %v553 = vld [vmem:[%s6 + $0xb8] sm:$0xff]
    %v554 = vld [vmem:[%s6 + $0xc0] sm:$0xff]
    %v555 = vld [vmem:[%s6 + $0xc8] sm:$0xff]
    %v556 = vld [vmem:[%s6 + $0xd0] sm:$0xff]
    %v557 = vld [vmem:[%s6 + $0xd8] sm:$0xff]
    %v558 = vld [vmem:[%s6 + $0xe0] sm:$0xff]
    %v559 = vld [vmem:[%s6 + $0xe8] sm:$0xff]
    %v560 = vld [vmem:[%s6 + $0xf0] sm:$0xff]
    %v561 = vld [vmem:[%s6 + $0xf8] sm:$0xff]
    %s562 = scalar_lea.vmem %s8, 2
    %v563 = vld [vmem:[%s562] ss:$4 sm:$0x3]
    %v565 = vperm.slane %v563, 0
    %v566 = vperm.slane %v563, 1
    %569 = vmatpush.msra.mxu0 %v560
    %570 = vmatpush.msra.mxu0 %v558
    %571 = vmatpush.msra.mxu0 %v556
    %572 = vmatpush.msra.mxu0 %v554
    %573 = vmatpush.msra.mxu0 %v552
    %574 = vmatpush.msra.mxu0 %v550
    %575 = vmatpush.msra.mxu0 %v548
    %576 = vmatpush.msra.mxu0 %v546
    %577 = vmatpush.msra.mxu0 %v544
    %578 = vmatpush.msra.mxu0 %v542
    %579 = vmatpush.msra.mxu0 %v540
    %580 = vmatpush.msra.mxu0 %v538
    %581 = vmatpush.msra.mxu0 %v536
    %582 = vmatpush.msra.mxu0 %v534
    %583 = vmatpush.msra.mxu0 %v532
    %584 = vmatpush.msra.mxu0 %v530
    %585 = vmatmul.f32.gmra.mxu0 %v529
    %v586 = vpop.f32.mrf.mxu0
    %v587 = vadd.f32 %v565, %v586
    %588 = vdwg.mxu0
    %589 = vmatpush.msra.mxu0 %v561
    %590 = vmatpush.msra.mxu0 %v559
    %591 = vmatpush.msra.mxu0 %v557
    %592 = vmatpush.msra.mxu0 %v555
    %593 = vmatpush.msra.mxu0 %v553
    %594 = vmatpush.msra.mxu0 %v551
    %595 = vmatpush.msra.mxu0 %v549
    %596 = vmatpush.msra.mxu0 %v547
    %597 = vmatpush.msra.mxu0 %v545
    %598 = vmatpush.msra.mxu0 %v543
    %599 = vmatpush.msra.mxu0 %v541
    %600 = vmatpush.msra.mxu0 %v539
    %601 = vmatpush.msra.mxu0 %v537
    %602 = vmatpush.msra.mxu0 %v535
    %603 = vmatpush.msra.mxu0 %v533
    %604 = vmatpush.msra.mxu0 %v531
    %605 = vmatmul.f32.gmra.mxu0 %v529
    %v606 = vpop.f32.mrf.mxu0
    %v607 = vadd.f32 %v566, %v606
    %608 = vdwg.mxu0
    %v609 = vmax.f32 %v587, 0.0
    %v610 = vmax.f32 %v607, 0.0
    %v611 = vld [vmem:[%s7] sm:$0xff]
    %v612 = vld [vmem:[%s7 + $0x8] sm:$0xff]
    %v613 = vld [vmem:[%s7 + $0x10] sm:$0xff]
    %v614 = vld [vmem:[%s7 + $0x18] sm:$0xff]
    %v615 = vld [vmem:[%s7 + $0x20] sm:$0xff]
    %v616 = vld [vmem:[%s7 + $0x28] sm:$0xff]
    %v617 = vld [vmem:[%s7 + $0x30] sm:$0xff]
    %v618 = vld [vmem:[%s7 + $0x38] sm:$0xff]
    %v619 = vld [vmem:[%s7 + $0x40] sm:$0xff]
    %v620 = vld [vmem:[%s7 + $0x48] sm:$0xff]
    %v621 = vld [vmem:[%s7 + $0x50] sm:$0xff]
    %v622 = vld [vmem:[%s7 + $0x58] sm:$0xff]
    %v623 = vld [vmem:[%s7 + $0x60] sm:$0xff]
    %v624 = vld [vmem:[%s7 + $0x68] sm:$0xff]
    %v625 = vld [vmem:[%s7 + $0x70] sm:$0xff]
    %v626 = vld [vmem:[%s7 + $0x78] sm:$0xff]
    %v627 = vld [vmem:[%s7 + $0x80] sm:$0xff]
    %v628 = vld [vmem:[%s7 + $0x88] sm:$0xff]
    %v629 = vld [vmem:[%s7 + $0x90] sm:$0xff]
    %v630 = vld [vmem:[%s7 + $0x98] sm:$0xff]
    %v631 = vld [vmem:[%s7 + $0xa0] sm:$0xff]
    %v632 = vld [vmem:[%s7 + $0xa8] sm:$0xff]
    %v633 = vld [vmem:[%s7 + $0xb0] sm:$0xff]
    %v634 = vld [vmem:[%s7 + $0xb8] sm:$0xff]
    %v635 = vld [vmem:[%s7 + $0xc0] sm:$0xff]
    %v636 = vld [vmem:[%s7 + $0xc8] sm:$0xff]
    %v637 = vld [vmem:[%s7 + $0xd0] sm:$0xff]
    %v638 = vld [vmem:[%s7 + $0xd8] sm:$0xff]
    %v639 = vld [vmem:[%s7 + $0xe0] sm:$0xff]
    %v640 = vld [vmem:[%s7 + $0xe8] sm:$0xff]
    %v641 = vld [vmem:[%s7 + $0xf0] sm:$0xff]
    %v642 = vld [vmem:[%s7 + $0xf8] sm:$0xff]
    %v643 = vld [vmem:[%s8 + $0x3] sm:$0x1]
    %v644 = vperm.slane %v643, 0
    %645 = vmatpush.msra.mxu0 %v626
    %646 = vmatpush.msra.mxu0 %v625
    %647 = vmatpush.msra.mxu0 %v624
    %648 = vmatpush.msra.mxu0 %v623
    %649 = vmatpush.msra.mxu0 %v622
    %650 = vmatpush.msra.mxu0 %v621
    %651 = vmatpush.msra.mxu0 %v620
    %652 = vmatpush.msra.mxu0 %v619
    %653 = vmatpush.msra.mxu0 %v618
    %654 = vmatpush.msra.mxu0 %v617
    %655 = vmatpush.msra.mxu0 %v616
    %656 = vmatpush.msra.mxu0 %v615
    %657 = vmatpush.msra.mxu0 %v614
    %658 = vmatpush.msra.mxu0 %v613
    %659 = vmatpush.msra.mxu0 %v612
    %660 = vmatpush.msra.mxu0 %v611
    %661 = vmatmul.f32.gmra.mxu0 %v609
    %v662 = vpop.f32.mrf.mxu0
    %v663 = vadd.f32 %v644, %v662
    %664 = vdwg.mxu0
    %665 = vmatpush.msra.mxu0 %v642
    %666 = vmatpush.msra.mxu0 %v641
    %667 = vmatpush.msra.mxu0 %v640
    %668 = vmatpush.msra.mxu0 %v639
    %669 = vmatpush.msra.mxu0 %v638
    %670 = vmatpush.msra.mxu0 %v637
    %671 = vmatpush.msra.mxu0 %v636
    %672 = vmatpush.msra.mxu0 %v635
    %673 = vmatpush.msra.mxu0 %v634
    %674 = vmatpush.msra.mxu0 %v633
    %675 = vmatpush.msra.mxu0 %v632
    %676 = vmatpush.msra.mxu0 %v631
    %677 = vmatpush.msra.mxu0 %v630
    %678 = vmatpush.msra.mxu0 %v629
    %679 = vmatpush.msra.mxu0 %v628
    %680 = vmatpush.msra.mxu0 %v627
    %681 = vmatmul.f32.gmra.mxu0 %v610
    %v682 = vpop.f32.mrf.mxu0
    %v683 = vadd.f32 %v663, %v682
    %684 = vdwg.mxu0
    %vm685 = vcmask 58368
    %686 = vst.msk [vmem:[#allocation11] sm:$0x3] %vm685, %v683
    // Predicated region
    $region58: #{tpu_custom_call.1} parent=1 // pred_check
      _
    $region59: #{tpu_custom_call.1} parent=1 // pred_check_branch
      %688 = sbr.rel (0) target = $region61
    $region60: #{tpu_custom_call.1} parent=1 // pred_region
      %690 = vsyncadd [#allocation4], 0
      %s692 = sshll.u32 [#allocation11], 4
      %s693 = int_to_ptr.vmem [resolvable:$true] %s692
      %s694 = sshll.u32 %s9, 4
      %s695 = int_to_ptr.hbm [resolvable:$true] %s694
      %697 = dma.vmem_to_hbm [thread:$0]  %s693, 32, %s695, [#allocation4]
    $region61: #{tpu_custom_call.1} parent=1 // pred_fallthru
      _
    // Predicated region
    $region62: #{tpu_custom_call.1} parent=1 // pred_check
      _
    $region63: #{tpu_custom_call.1} parent=1 // pred_check_branch
      %699 = sbr.rel (0) target = $region65
    $region64: #{tpu_custom_call.1} parent=1 // pred_region
      %701 = dma.done [#allocation4], 32
    $region65: #{tpu_custom_call.1} parent=1 // pred_fallthru
      _
    %702 = vsyncpa [#allocation3], 1
    %703 = vsyncpa [#allocation6], 1
    %704 = vsyncpa [#allocation9], 1
    %705 = vsyncpa [#allocation4], 1

</llo_original>
